<compile_context>
chip_gen: v6e
topology: v6e:2x2x1
jax: 0.10.0
libtpu: 0.0.40
codegen_flags: <defaults>
</compile_context>

<pallas_src>
import functools

import jax
import jax.numpy as jnp
from jax.experimental import pallas as pl
from jax.experimental.pallas import tpu as pltpu


# ---------------------------------------------------------------------------
# Kernel: 3 GEMMs, fully fused dueling head.
# ---------------------------------------------------------------------------
def dueling_dqn_kernel(
    x_ref,          # (TB, IN)
    w1_ref, b1_ref,         # (IN, H), (1, H)
    wva_ref, bva_ref,       # (H, 2H), (1, 2H)   fused value|advantage hidden layer
    whead_ref, bhead_ref,   # (2H, A), (1, A)    fused value+advantage head (mean pre-folded)
    q_ref,          # (TB, A)
):
    x = x_ref[...]

    # Shared trunk: fc1 + ReLU
    h = jnp.dot(x, w1_ref[...], preferred_element_type=jnp.float32) + b1_ref[...]
    h = jnp.maximum(h, 0.0)

    # Fused value|advantage hidden layers: one (H, 2H) GEMM + one ReLU.
    va = jnp.dot(h, wva_ref[...], preferred_element_type=jnp.float32) + bva_ref[...]
    va = jnp.maximum(va, 0.0)

    # Fused dueling head: value broadcast + centered advantage in a single GEMM.
    # NOTE: output last dim A=4 (< 128 lanes) => masked stores; negligible here.
    q_ref[...] = (
        jnp.dot(va, whead_ref[...], preferred_element_type=jnp.float32) + bhead_ref[...]
    )


# ---------------------------------------------------------------------------
# Wrapper: weight preprocessing (pure algebra, done once) + batch-tiled pallas_call.
# ---------------------------------------------------------------------------
def fuse_params(p):
    """Fold the dueling combination into the weights (numerically equivalent
    up to fp reorder) and concatenate the two streams."""
    H = p["w1"].shape[1]
    A = p["wa2"].shape[1]

    # Fused hidden layer: [fc_value | fc_advantage]
    w_va = jnp.concatenate([p["wv1"], p["wa1"]], axis=1)      # (H, 2H)
    b_va = jnp.concatenate([p["bv1"], p["ba1"]], axis=1)      # (1, 2H)

    # Fold mean-subtraction into the advantage head.
    wa2_c = p["wa2"] - jnp.mean(p["wa2"], axis=1, keepdims=True)   # (H, A)
    ba2_c = p["ba2"] - jnp.mean(p["ba2"], axis=1, keepdims=True)   # (1, A)

    # Fused head: q = [v | a] @ [[wv2 broadcast to A]; [wa2_c]] + (bv2 + ba2_c)
    w_head = jnp.concatenate(
        [jnp.broadcast_to(p["wv2"], (H, A)), wa2_c], axis=0)       # (2H, A)
    b_head = p["bv2"] + ba2_c                                      # (1, A)

    return dict(w1=p["w1"], b1=p["b1"], w_va=w_va, b_va=b_va,
                w_head=w_head, b_head=b_head)


def dueling_dqn_forward(x, fused, *, tile_b=512):
    """x: (B, input_size) float32. fused: output of fuse_params."""
    B, IN = x.shape
    H = fused["w1"].shape[1]
    A = fused["w_head"].shape[1]

    # Batch tile: multiple of 8 (sublane), capped at tile_b; pad batch if needed.
    tb = min(tile_b, max(8, ((B + 7) // 8) * 8))
    pad_b = pl.cdiv(B, tb) * tb
    if pad_b != B:
        x = jnp.pad(x, ((0, pad_b - B), (0, 0)))
    grid = (pad_b // tb,)

    # Weights get the same block index every step => stay resident in VMEM.
    in_specs = [
        pl.BlockSpec((tb, IN), lambda i: (i, 0)),        # x: tiled over batch
        pl.BlockSpec((IN, H), lambda i: (0, 0)),
        pl.BlockSpec((1, H), lambda i: (0, 0)),
        pl.BlockSpec((H, 2 * H), lambda i: (0, 0)),
        pl.BlockSpec((1, 2 * H), lambda i: (0, 0)),
        pl.BlockSpec((2 * H, A), lambda i: (0, 0)),
        pl.BlockSpec((1, A), lambda i: (0, 0)),
    ]
    out_specs = pl.BlockSpec((tb, A), lambda i: (i, 0))

    q = pl.pallas_call(
        dueling_dqn_kernel,
        out_shape=jax.ShapeDtypeStruct((pad_b, A), jnp.float32),
        grid=grid,
        in_specs=in_specs,
        out_specs=out_specs,
        compiler_params=pltpu.CompilerParams(
            dimension_semantics=("parallel",)),
    )(x, fused["w1"], fused["b1"], fused["w_va"], fused["b_va"],
      fused["w_head"], fused["b_head"])

    return q[:B]


# ---------------------------------------------------------------------------
# Param init (matches PyTorch nn.Linear default init) + pure-JAX reference.
# ---------------------------------------------------------------------------
def init_params(key, input_size=16, hidden_size=128, output_size=4):
    ks = jax.random.split(key, 10)

    def linear(kw, kb, fan_in, fan_out):
        bound = 1.0 / jnp.sqrt(fan_in)
        w = jax.random.uniform(kw, (fan_in, fan_out), jnp.float32, -bound, bound)
        b = jax.random.uniform(kb, (1, fan_out), jnp.float32, -bound, bound)
        return w, b

    w1, b1 = linear(ks[0], ks[1], input_size, hidden_size)
    wv1, bv1 = linear(ks[2], ks[3], hidden_size, hidden_size)
    wv2, bv2 = linear(ks[4], ks[5], hidden_size, 1)
    wa1, ba1 = linear(ks[6], ks[7], hidden_size, hidden_size)
    wa2, ba2 = linear(ks[8], ks[9], hidden_size, output_size)
    return dict(w1=w1, b1=b1, wv1=wv1, bv1=bv1, wv2=wv2, bv2=bv2,
                wa1=wa1, ba1=ba1, wa2=wa2, ba2=ba2)


def reference_forward(x, p):
    """Pure-JAX reference mirroring the PyTorch forward (unfused)."""
    h = jnp.maximum(x @ p["w1"] + p["b1"], 0.0)
    v = jnp.maximum(h @ p["wv1"] + p["bv1"], 0.0)
    val = v @ p["wv2"] + p["bv2"]
    a = jnp.maximum(h @ p["wa1"] + p["ba1"], 0.0)
    adv = a @ p["wa2"] + p["ba2"]
    return val + (adv - adv.mean(axis=1, keepdims=True))


if __name__ == "__main__":
    key = jax.random.PRNGKey(0)
    k_params, k_x = jax.random.split(key)

    input_size, hidden_size, output_size = 16, 128, 4
    batch = 8

    params = init_params(k_params, input_size, hidden_size, output_size)
    fused = fuse_params(params)
    x = jax.random.normal(k_x, (batch, input_size), jnp.float32)

    fwd = jax.jit(functools.partial(dueling_dqn_forward, tile_b=512))
    q = fwd(x, fused)
    jax.block_until_ready(q)

    q_ref = reference_forward(x, params)
    assert q.shape == (batch, output_size)
    assert jnp.allclose(q, q_ref, atol=1e-4, rtol=1e-4), "mismatch vs reference"

    print("KERNEL_OK")
</pallas_src>

<mosaic_0001>
module attributes {stable_mosaic.version = 11 : i64} {
  func.func @dueling_dqn_kernel(%arg0: i32, %arg1: memref<8x16xf32, #tpu.memory_space<vmem>>, %arg2: memref<16x128xf32, #tpu.memory_space<vmem>>, %arg3: memref<1x128xf32, #tpu.memory_space<vmem>>, %arg4: memref<128x256xf32, #tpu.memory_space<vmem>>, %arg5: memref<1x256xf32, #tpu.memory_space<vmem>>, %arg6: memref<256x4xf32, #tpu.memory_space<vmem>>, %arg7: memref<1x4xf32, #tpu.memory_space<vmem>>, %arg8: memref<8x4xf32, #tpu.memory_space<vmem>>) attributes {dimension_semantics = [#tpu.dimension_semantics<parallel>], iteration_bounds = array<i64: 1>, scalar_prefetch = 0 : i64, scratch_operands = 0 : i64, tpu.core_type = #tpu.core_type<tc>, window_params = [{transform_indices = @transform_0, window_bounds = array<i64: 8, 16>}, {pipeline_mode = #tpu.pipeline_mode<synchronous>, transform_indices = @transform_1, window_bounds = array<i64: 16, 128>}, {pipeline_mode = #tpu.pipeline_mode<synchronous>, transform_indices = @transform_2, window_bounds = array<i64: 1, 128>}, {pipeline_mode = #tpu.pipeline_mode<synchronous>, transform_indices = @transform_3, window_bounds = array<i64: 128, 256>}, {pipeline_mode = #tpu.pipeline_mode<synchronous>, transform_indices = @transform_4, window_bounds = array<i64: 1, 256>}, {pipeline_mode = #tpu.pipeline_mode<synchronous>, transform_indices = @transform_5, window_bounds = array<i64: 256, 4>}, {pipeline_mode = #tpu.pipeline_mode<synchronous>, transform_indices = @transform_6, window_bounds = array<i64: 1, 4>}, {transform_indices = @transform_7, window_bounds = array<i64: 8, 4>}]} {
    %c0 = arith.constant 0 : index
    %c0_0 = arith.constant 0 : index
    %0 = vector.load %arg1[%c0, %c0_0] : memref<8x16xf32, #tpu.memory_space<vmem>>, vector<8x16xf32>
    %c0_1 = arith.constant 0 : index
    %c0_2 = arith.constant 0 : index
    %1 = vector.load %arg2[%c0_1, %c0_2] : memref<16x128xf32, #tpu.memory_space<vmem>>, vector<16x128xf32>
    %cst = arith.constant dense<0.000000e+00> : vector<8x128xf32>
    %2 = tpu.matmul %0, %1, %cst {dimension_numbers = #tpu.dot_dimension_numbers<[1], [0], [0], [1], [0, 0, 1, 1], [], []>} : vector<8x16xf32>, vector<16x128xf32>, vector<8x128xf32> -> vector<8x128xf32>
    %c0_3 = arith.constant 0 : index
    %c0_4 = arith.constant 0 : index
    %3 = vector.load %arg3[%c0_3, %c0_4] : memref<1x128xf32, #tpu.memory_space<vmem>>, vector<1x128xf32>
    %4 = vector.broadcast %3 : vector<1x128xf32> to vector<8x128xf32>
    %5 = arith.addf %2, %4 : vector<8x128xf32>
    %cst_5 = arith.constant 0.000000e+00 : f32
    %6 = vector.broadcast %cst_5 : f32 to vector<8x128xf32>
    %7 = arith.maximumf %5, %6 : vector<8x128xf32>
    %c0_6 = arith.constant 0 : index
    %c0_7 = arith.constant 0 : index
    %8 = vector.load %arg4[%c0_6, %c0_7] : memref<128x256xf32, #tpu.memory_space<vmem>>, vector<128x256xf32>
    %cst_8 = arith.constant dense<0.000000e+00> : vector<8x256xf32>
    %9 = tpu.matmul %7, %8, %cst_8 {dimension_numbers = #tpu.dot_dimension_numbers<[1], [0], [0], [1], [0, 0, 1, 1], [], []>} : vector<8x128xf32>, vector<128x256xf32>, vector<8x256xf32> -> vector<8x256xf32>
    %c0_9 = arith.constant 0 : index
    %c0_10 = arith.constant 0 : index
    %10 = vector.load %arg5[%c0_9, %c0_10] : memref<1x256xf32, #tpu.memory_space<vmem>>, vector<1x256xf32>
    %11 = vector.broadcast %10 : vector<1x256xf32> to vector<8x256xf32>
    %12 = arith.addf %9, %11 : vector<8x256xf32>
    %cst_11 = arith.constant 0.000000e+00 : f32
    %13 = vector.broadcast %cst_11 : f32 to vector<8x256xf32>
    %14 = arith.maximumf %12, %13 : vector<8x256xf32>
    %c0_12 = arith.constant 0 : index
    %c0_13 = arith.constant 0 : index
    %15 = vector.load %arg6[%c0_12, %c0_13] : memref<256x4xf32, #tpu.memory_space<vmem>>, vector<256x4xf32>
    %cst_14 = arith.constant dense<0.000000e+00> : vector<8x4xf32>
    %16 = tpu.matmul %14, %15, %cst_14 {dimension_numbers = #tpu.dot_dimension_numbers<[1], [0], [0], [1], [0, 0, 1, 1], [], []>} : vector<8x256xf32>, vector<256x4xf32>, vector<8x4xf32> -> vector<8x4xf32>
    %c0_15 = arith.constant 0 : index
    %c0_16 = arith.constant 0 : index
    %17 = vector.load %arg7[%c0_15, %c0_16] : memref<1x4xf32, #tpu.memory_space<vmem>>, vector<1x4xf32>
    %18 = vector.broadcast %17 : vector<1x4xf32> to vector<8x4xf32>
    %19 = arith.addf %16, %18 : vector<8x4xf32>
    %c0_17 = arith.constant 0 : index
    %c0_18 = arith.constant 0 : index
    %20 = vector.load %arg8[%c0_17, %c0_18] : memref<8x4xf32, #tpu.memory_space<vmem>>, vector<8x4xf32>
    tpu.vector_store %arg8[%c0_17, %c0_18], %19 {strides = array<i32>} : memref<8x4xf32, #tpu.memory_space<vmem>>, vector<8x4xf32>,
    return
  }
  func.func @transform_0(%arg0: i32) -> (i32, i32) {
    %c0_i32 = arith.constant 0 : i32
    %c0_i32_0 = arith.constant 0 : i32
    return %arg0, %c0_i32 : i32, i32
  }
  func.func @transform_1(%arg0: i32) -> (i32, i32) {
    %c0_i32 = arith.constant 0 : i32
    %c0_i32_0 = arith.constant 0 : i32
    %c0_i32_1 = arith.constant 0 : i32
    return %c0_i32, %c0_i32_0 : i32, i32
  }
  func.func @transform_2(%arg0: i32) -> (i32, i32) {
    %c0_i32 = arith.constant 0 : i32
    %c0_i32_0 = arith.constant 0 : i32
    %c0_i32_1 = arith.constant 0 : i32
    return %c0_i32, %c0_i32_0 : i32, i32
  }
  func.func @transform_3(%arg0: i32) -> (i32, i32) {
    %c0_i32 = arith.constant 0 : i32
    %c0_i32_0 = arith.constant 0 : i32
    %c0_i32_1 = arith.constant 0 : i32
    return %c0_i32, %c0_i32_0 : i32, i32
  }
  func.func @transform_4(%arg0: i32) -> (i32, i32) {
    %c0_i32 = arith.constant 0 : i32
    %c0_i32_0 = arith.constant 0 : i32
    %c0_i32_1 = arith.constant 0 : i32
    return %c0_i32, %c0_i32_0 : i32, i32
  }
  func.func @transform_5(%arg0: i32) -> (i32, i32) {
    %c0_i32 = arith.constant 0 : i32
    %c0_i32_0 = arith.constant 0 : i32
    %c0_i32_1 = arith.constant 0 : i32
    return %c0_i32, %c0_i32_0 : i32, i32
  }
  func.func @transform_6(%arg0: i32) -> (i32, i32) {
    %c0_i32 = arith.constant 0 : i32
    %c0_i32_0 = arith.constant 0 : i32
    %c0_i32_1 = arith.constant 0 : i32
    return %c0_i32, %c0_i32_0 : i32, i32
  }
  func.func @transform_7(%arg0: i32) -> (i32, i32) {
    %c0_i32 = arith.constant 0 : i32
    %c0_i32_0 = arith.constant 0 : i32
    return %arg0, %c0_i32 : i32, i32
  }
}

</mosaic_0001>

<llo_original>
// kernel: dueling_dqn_forward.1
$region0: #{dueling_dqn_forward.1}
  #allocation0 [shape = 'u32[]', space=smem, size = 0x4, offset = 0x4, fixed_abs, tag = 'smem constant byte address 0x4 - core index']
  #allocation1 [shape = 'u32[144,128]{1,0:T(1,128)}', space=vmem, size = 0x12000, scoped, tag = 'internal scratch']
  %s0 = inlined_call_operand.hbm [shape: f32[8,16], index: 0, kind: input, shape index: {}]
  %s1 = inlined_call_operand.vmem [shape: f32[16,128], index: 1, kind: input, shape index: {}]
  %s2 = inlined_call_operand.hbm [shape: f32[1,128], index: 2, kind: input, shape index: {}]
  %s3 = inlined_call_operand.vmem [shape: f32[128,256], index: 3, kind: input, shape index: {}]
  %s4 = inlined_call_operand.vmem [shape: f32[1,256], index: 4, kind: input, shape index: {}]
  %s5 = inlined_call_operand.vmem [shape: f32[256,4], index: 5, kind: input, shape index: {}]
  %s6 = inlined_call_operand.hbm [shape: f32[1,4], index: 6, kind: input, shape index: {}]
  %s7 = inlined_call_operand.vmem [shape: f32[8,4], index: 7, kind: output, shape index: {}]
  %s8 = sld [smem:[#allocation0]]
  $region50: #{dueling_dqn_forward.1} parent=0
    _
  %s10 = ssub.s32 1, %s8
  %s11 = scalar_select 0, %s10, %s8
  $region1: #{dueling_dqn_forward.1} parent=0
    #allocation2 [shape = 'u8[4096]{0}', space=vmem, size = 0x1000, scoped, tag = 'input window, operand 0, single buffered']
    #allocation3 [shape = 's32[1]{0}', space=sflag, size = 0x4, scoped, tag = 'scoped memory for dueling_dqn_forward.1']
    #allocation4 [shape = 'u8[512]{0}', space=vmem, size = 0x400, scoped, tag = 'input window, operand 2, single buffered']
    #allocation5 [shape = 's32[1]{0}', space=sflag, size = 0x4, scoped, tag = 'scoped memory for dueling_dqn_forward.1']
    #allocation6 [shape = 'u8[512]{0}', space=vmem, size = 0x400, scoped, tag = 'input window, operand 6, single buffered']
    %12 = vsyncpa [#allocation3], 0
    %13 = vsyncpa [#allocation5], 0
    // Predicated region
    $region2: #{dueling_dqn_forward.1} parent=1 // pred_check
      _
    $region3: #{dueling_dqn_forward.1} parent=1 // pred_check_branch
      %15 = sbr.rel (0) target = $region5
    $region4: #{dueling_dqn_forward.1} parent=1 // pred_region
      %s17 = ssub.s32 128, 128
      %18 = vsyncadd [#allocation3], %s17
      %s20 = sshll.u32 [#allocation2], 4
      %s21 = int_to_ptr.vmem [resolvable:$true] %s20
      %23 = dma.hbm_to_vmem [thread:$0]  %s0, 128, %s21, [#allocation3]
    $region5: #{dueling_dqn_forward.1} parent=1 // pred_fallthru
      _
    // Predicated region
    $region6: #{dueling_dqn_forward.1} parent=1 // pred_check
      _
    $region7: #{dueling_dqn_forward.1} parent=1 // pred_check_branch
      %25 = sbr.rel (0) target = $region9
    $region8: #{dueling_dqn_forward.1} parent=1 // pred_region
      _
    $region9: #{dueling_dqn_forward.1} parent=1 // pred_fallthru
      _
    // Predicated region
    $region10: #{dueling_dqn_forward.1} parent=1 // pred_check
      _
    $region11: #{dueling_dqn_forward.1} parent=1 // pred_check_branch
      %27 = sbr.rel (0) target = $region13
    $region12: #{dueling_dqn_forward.1} parent=1 // pred_region
      %s29 = ssub.s32 16, 16
      %30 = vsyncadd [#allocation5], %s29
      %s32 = sshll.u32 [#allocation4], 4
      %s33 = int_to_ptr.vmem [resolvable:$true] %s32
      %35 = dma.hbm_to_vmem [thread:$0]  %s2, 16, %s33, [#allocation5]
    $region13: #{dueling_dqn_forward.1} parent=1 // pred_fallthru
      _
    // Predicated region
    $region14: #{dueling_dqn_forward.1} parent=1 // pred_check
      _
    $region15: #{dueling_dqn_forward.1} parent=1 // pred_check_branch
      %37 = sbr.rel (0) target = $region17
    $region16: #{dueling_dqn_forward.1} parent=1 // pred_region
      _
    $region17: #{dueling_dqn_forward.1} parent=1 // pred_fallthru
      _
    // Predicated region
    $region18: #{dueling_dqn_forward.1} parent=1 // pred_check
      _
    $region19: #{dueling_dqn_forward.1} parent=1 // pred_check_branch
      %39 = sbr.rel (0) target = $region21
    $region20: #{dueling_dqn_forward.1} parent=1 // pred_region
      _
    $region21: #{dueling_dqn_forward.1} parent=1 // pred_fallthru
      _
    // Predicated region
    $region22: #{dueling_dqn_forward.1} parent=1 // pred_check
      _
    $region23: #{dueling_dqn_forward.1} parent=1 // pred_check_branch
      %41 = sbr.rel (0) target = $region25
    $region24: #{dueling_dqn_forward.1} parent=1 // pred_region
      _
    $region25: #{dueling_dqn_forward.1} parent=1 // pred_fallthru
      _
    // Predicated region
    $region26: #{dueling_dqn_forward.1} parent=1 // pred_check
      _
    $region27: #{dueling_dqn_forward.1} parent=1 // pred_check_branch
      %43 = sbr.rel (0) target = $region29
    $region28: #{dueling_dqn_forward.1} parent=1 // pred_region
      %s45 = ssub.s32 16, 16
      %46 = vsyncadd [#allocation5], %s45
      %s48 = sshll.u32 [#allocation6], 4
      %s49 = int_to_ptr.vmem [resolvable:$true] %s48
      %51 = dma.hbm_to_vmem [thread:$0]  %s6, 16, %s49, [#allocation5]
    $region29: #{dueling_dqn_forward.1} parent=1 // pred_fallthru
      _
    // Predicated region
    $region30: #{dueling_dqn_forward.1} parent=1 // pred_check
      _
    $region31: #{dueling_dqn_forward.1} parent=1 // pred_check_branch
      %53 = sbr.rel (0) target = $region33
    $region32: #{dueling_dqn_forward.1} parent=1 // pred_region
      %54 = dma.done [#allocation3], 128
    $region33: #{dueling_dqn_forward.1} parent=1 // pred_fallthru
      _
    // Predicated region
    $region34: #{dueling_dqn_forward.1} parent=1 // pred_check
      _
    $region35: #{dueling_dqn_forward.1} parent=1 // pred_check_branch
      %56 = sbr.rel (0) target = $region37
    $region36: #{dueling_dqn_forward.1} parent=1 // pred_region
      %57 = dma.done [#allocation5], 16
    $region37: #{dueling_dqn_forward.1} parent=1 // pred_fallthru
      _
    // Predicated region
    $region38: #{dueling_dqn_forward.1} parent=1 // pred_check
      _
    $region39: #{dueling_dqn_forward.1} parent=1 // pred_check_branch
      %59 = sbr.rel (0) target = $region41
    $region40: #{dueling_dqn_forward.1} parent=1 // pred_region
      %60 = dma.done [#allocation5], 16
    $region41: #{dueling_dqn_forward.1} parent=1 // pred_fallthru
      _
    %v61 = vld [vmem:[#allocation2] sm:$0xff]
    %v62 = vld [vmem:[%s1] sm:$0xff]
    %v63 = vld [vmem:[%s1 + $0x8] sm:$0xff]
    %v64 = vld [vmem:[#allocation4] sm:$0x1]
    %v66 = vlaneseq
    %v67 = vshrl.u32 %v66, 7
    %v68 = vsub.s32 0, %v67
    %v69 = vrot.slane %v64, %v68
    %vm71 = vcmask 130048
    %v73 = vsel %vm71, %v61, 0
    %75 = vmatprep.subr.mxu0 0.0
    %76 = vmatpush1.msra.mxu0 0.0
    %77 = vmatprep.subr.mxu0 0.0
    %78 = vmatpush1.msra.mxu0 0.0
    %79 = vmatprep.subr.mxu0 0.0
    %80 = vmatpush1.msra.mxu0 0.0
    %81 = vmatprep.subr.mxu0 0.0
    %82 = vmatpush1.msra.mxu0 0.0
    %83 = vmatprep.subr.mxu0 0.0
    %84 = vmatpush1.msra.mxu0 0.0
    %85 = vmatprep.subr.mxu0 0.0
    %86 = vmatpush1.msra.mxu0 0.0
    %87 = vmatprep.subr.mxu0 0.0
    %88 = vmatpush1.msra.mxu0 0.0
    %89 = vmatprep.subr.mxu0 0.0
    %90 = vmatpush1.msra.mxu0 0.0
    %91 = vmatprep.subr.mxu0 0.0
    %92 = vmatpush1.msra.mxu0 0.0
    %93 = vmatprep.subr.mxu0 0.0
    %94 = vmatpush1.msra.mxu0 0.0
    %95 = vmatprep.subr.mxu0 0.0
    %96 = vmatpush1.msra.mxu0 0.0
    %97 = vmatprep.subr.mxu0 0.0
    %98 = vmatpush1.msra.mxu0 0.0
    %99 = vmatprep.subr.mxu0 0.0
    %100 = vmatpush1.msra.mxu0 0.0
    %101 = vmatprep.subr.mxu0 0.0
    %102 = vmatpush1.msra.mxu0 0.0
    %103 = vmatprep.subr.mxu0 0.0
    %104 = vmatpush1.msra.mxu0 %v63
    %105 = vmatprep.subr.mxu0 0.0
    %106 = vmatpush1.msra.mxu0 %v62
    %107 = vmatprep.subr.mxu0 0.0
    %108 = vmatpush2.msra.mxu0 0.0
    %109 = vmatprep.subr.mxu0 0.0
    %110 = vmatpush2.msra.mxu0 0.0
    %111 = vmatprep.subr.mxu0 0.0
    %112 = vmatpush2.msra.mxu0 0.0
    %113 = vmatprep.subr.mxu0 0.0
    %114 = vmatpush2.msra.mxu0 0.0
    %115 = vmatprep.subr.mxu0 0.0
    %116 = vmatpush2.msra.mxu0 0.0
    %117 = vmatprep.subr.mxu0 0.0
    %118 = vmatpush2.msra.mxu0 0.0
    %119 = vmatprep.subr.mxu0 0.0
    %120 = vmatpush2.msra.mxu0 0.0
    %121 = vmatprep.subr.mxu0 0.0
    %122 = vmatpush2.msra.mxu0 0.0
    %123 = vmatprep.subr.mxu0 0.0
    %124 = vmatpush2.msra.mxu0 0.0
    %125 = vmatprep.subr.mxu0 0.0
    %126 = vmatpush2.msra.mxu0 0.0
    %127 = vmatprep.subr.mxu0 0.0
    %128 = vmatpush2.msra.mxu0 0.0
    %129 = vmatprep.subr.mxu0 0.0
    %130 = vmatpush2.msra.mxu0 0.0
    %131 = vmatprep.subr.mxu0 0.0
    %132 = vmatpush2.msra.mxu0 0.0
    %133 = vmatprep.subr.mxu0 0.0
    %134 = vmatpush2.msra.mxu0 0.0
    %135 = vmatprep.subr.mxu0 0.0
    %136 = vmatpush2.msra.mxu0 0.0
    %137 = vmatprep.subr.mxu0 0.0
    %138 = vmatpush2.msra.mxu0 0.0
    %139 = vmatprep.mubr.f32.mxu0 0.0
    %140 = vmatmul.mubr.f32.gmra.mxu0 %v73
    %v141 = vpop.f32.mrf.mxu0
    %v142 = vadd.f32 %v69, %v141
    %v143 = vpop.f32.mrf.mxu0
    %144 = vdwg.mxu0
    %v145 = vmax.f32 %v142, 0.0
    %v146 = vld [vmem:[%s3] sm:$0xff]
    %v147 = vld [vmem:[%s3 + $0x8] sm:$0xff]
    %v148 = vld [vmem:[%s3 + $0x10] sm:$0xff]
    %v149 = vld [vmem:[%s3 + $0x18] sm:$0xff]
    %v150 = vld [vmem:[%s3 + $0x20] sm:$0xff]
    %v151 = vld [vmem:[%s3 + $0x28] sm:$0xff]
    %v152 = vld [vmem:[%s3 + $0x30] sm:$0xff]
    %v153 = vld [vmem:[%s3 + $0x38] sm:$0xff]
    %v154 = vld [vmem:[%s3 + $0x40] sm:$0xff]
    %v155 = vld [vmem:[%s3 + $0x48] sm:$0xff]
    %v156 = vld [vmem:[%s3 + $0x50] sm:$0xff]
    %v157 = vld [vmem:[%s3 + $0x58] sm:$0xff]
    %v158 = vld [vmem:[%s3 + $0x60] sm:$0xff]
    %v159 = vld [vmem:[%s3 + $0x68] sm:$0xff]
    %v160 = vld [vmem:[%s3 + $0x70] sm:$0xff]
    %v161 = vld [vmem:[%s3 + $0x78] sm:$0xff]
    %v162 = vld [vmem:[%s3 + $0x80] sm:$0xff]
    %v163 = vld [vmem:[%s3 + $0x88] sm:$0xff]
    %v164 = vld [vmem:[%s3 + $0x90] sm:$0xff]
    %v165 = vld [vmem:[%s3 + $0x98] sm:$0xff]
    %v166 = vld [vmem:[%s3 + $0xa0] sm:$0xff]
    %v167 = vld [vmem:[%s3 + $0xa8] sm:$0xff]
    %v168 = vld [vmem:[%s3 + $0xb0] sm:$0xff]
    %v169 = vld [vmem:[%s3 + $0xb8] sm:$0xff]
    %v170 = vld [vmem:[%s3 + $0xc0] sm:$0xff]
    %v171 = vld [vmem:[%s3 + $0xc8] sm:$0xff]
    %v172 = vld [vmem:[%s3 + $0xd0] sm:$0xff]
    %v173 = vld [vmem:[%s3 + $0xd8] sm:$0xff]
    %v174 = vld [vmem:[%s3 + $0xe0] sm:$0xff]
    %v175 = vld [vmem:[%s3 + $0xe8] sm:$0xff]
    %v176 = vld [vmem:[%s3 + $0xf0] sm:$0xff]
    %v177 = vld [vmem:[%s3 + $0xf8] sm:$0xff]
    %v178 = vld [vmem:[%s4] sm:$0x3]
    %v180 = vlaneseq
    %v181 = vshrl.u32 %v180, 7
    %v182 = vsub.s32 0, %v181
    %v183 = vrot.slane %v178, %v182
    %v184 = vlaneseq
    %v185 = vshrl.u32 %v184, 7
    %v186 = vsub.s32 1, %v185
    %v187 = vrot.slane %v178, %v186
    %190 = vmatprep.subr.mxu0 %v177
    %191 = vmatpush1.msra.mxu0 %v176
    %192 = vmatprep.subr.mxu0 %v175
    %193 = vmatpush1.msra.mxu0 %v174
    %194 = vmatprep.subr.mxu0 %v173
    %195 = vmatpush1.msra.mxu0 %v172
    %196 = vmatprep.subr.mxu0 %v171
    %197 = vmatpush1.msra.mxu0 %v170
    %198 = vmatprep.subr.mxu0 %v169
    %199 = vmatpush1.msra.mxu0 %v168
    %200 = vmatprep.subr.mxu0 %v167
    %201 = vmatpush1.msra.mxu0 %v166
    %202 = vmatprep.subr.mxu0 %v165
    %203 = vmatpush1.msra.mxu0 %v164
    %204 = vmatprep.subr.mxu0 %v163
    %205 = vmatpush1.msra.mxu0 %v162
    %206 = vmatprep.subr.mxu0 %v161
    %207 = vmatpush1.msra.mxu0 %v160
    %208 = vmatprep.subr.mxu0 %v159
    %209 = vmatpush1.msra.mxu0 %v158
    %210 = vmatprep.subr.mxu0 %v157
    %211 = vmatpush1.msra.mxu0 %v156
    %212 = vmatprep.subr.mxu0 %v155
    %213 = vmatpush1.msra.mxu0 %v154
    %214 = vmatprep.subr.mxu0 %v153
    %215 = vmatpush1.msra.mxu0 %v152
    %216 = vmatprep.subr.mxu0 %v151
    %217 = vmatpush1.msra.mxu0 %v150
    %218 = vmatprep.subr.mxu0 %v149
    %219 = vmatpush1.msra.mxu0 %v148
    %220 = vmatprep.subr.mxu0 %v147
    %221 = vmatpush1.msra.mxu0 %v146
    %222 = vmatprep.subr.mxu0 0.0
    %223 = vmatpush2.msra.mxu0 0.0
    %224 = vmatprep.subr.mxu0 0.0
    %225 = vmatpush2.msra.mxu0 0.0
    %226 = vmatprep.subr.mxu0 0.0
    %227 = vmatpush2.msra.mxu0 0.0
    %228 = vmatprep.subr.mxu0 0.0
    %229 = vmatpush2.msra.mxu0 0.0
    %230 = vmatprep.subr.mxu0 0.0
    %231 = vmatpush2.msra.mxu0 0.0
    %232 = vmatprep.subr.mxu0 0.0
    %233 = vmatpush2.msra.mxu0 0.0
    %234 = vmatprep.subr.mxu0 0.0
    %235 = vmatpush2.msra.mxu0 0.0
    %236 = vmatprep.subr.mxu0 0.0
    %237 = vmatpush2.msra.mxu0 0.0
    %238 = vmatprep.subr.mxu0 0.0
    %239 = vmatpush2.msra.mxu0 0.0
    %240 = vmatprep.subr.mxu0 0.0
    %241 = vmatpush2.msra.mxu0 0.0
    %242 = vmatprep.subr.mxu0 0.0
    %243 = vmatpush2.msra.mxu0 0.0
    %244 = vmatprep.subr.mxu0 0.0
    %245 = vmatpush2.msra.mxu0 0.0
    %246 = vmatprep.subr.mxu0 0.0
    %247 = vmatpush2.msra.mxu0 0.0
    %248 = vmatprep.subr.mxu0 0.0
    %249 = vmatpush2.msra.mxu0 0.0
    %250 = vmatprep.subr.mxu0 0.0
    %251 = vmatpush2.msra.mxu0 0.0
    %252 = vmatprep.subr.mxu0 0.0
    %253 = vmatpush2.msra.mxu0 0.0
    %254 = vmatprep.mubr.f32.mxu0 0.0
    %255 = vmatmul.mubr.f32.gmra.mxu0 %v145
    %v256 = vpop.f32.mrf.mxu0
    %v257 = vadd.f32 %v183, %v256
    %v258 = vpop.f32.mrf.mxu0
    %v259 = vadd.f32 %v187, %v258
    %260 = vdwg.mxu0
    %v261 = vmax.f32 %v257, 0.0
    %v262 = vmax.f32 %v259, 0.0
    %v263 = vld [vmem:[%s5] sm:$0xff]
    %v264 = vld [vmem:[%s5 + $0x8] sm:$0xff]
    %v265 = vld [vmem:[%s5 + $0x10] sm:$0xff]
    %v266 = vld [vmem:[%s5 + $0x18] sm:$0xff]
    %v267 = vld [vmem:[%s5 + $0x20] sm:$0xff]
    %v268 = vld [vmem:[%s5 + $0x28] sm:$0xff]
    %v269 = vld [vmem:[%s5 + $0x30] sm:$0xff]
    %v270 = vld [vmem:[%s5 + $0x38] sm:$0xff]
    %v271 = vld [vmem:[%s5 + $0x40] sm:$0xff]
    %v272 = vld [vmem:[%s5 + $0x48] sm:$0xff]
    %v273 = vld [vmem:[%s5 + $0x50] sm:$0xff]
    %v274 = vld [vmem:[%s5 + $0x58] sm:$0xff]
    %v275 = vld [vmem:[%s5 + $0x60] sm:$0xff]
    %v276 = vld [vmem:[%s5 + $0x68] sm:$0xff]
    %v277 = vld [vmem:[%s5 + $0x70] sm:$0xff]
    %v278 = vld [vmem:[%s5 + $0x78] sm:$0xff]
    %v279 = vld [vmem:[%s5 + $0x80] sm:$0xff]
    %v280 = vld [vmem:[%s5 + $0x88] sm:$0xff]
    %v281 = vld [vmem:[%s5 + $0x90] sm:$0xff]
    %v282 = vld [vmem:[%s5 + $0x98] sm:$0xff]
    %v283 = vld [vmem:[%s5 + $0xa0] sm:$0xff]
    %v284 = vld [vmem:[%s5 + $0xa8] sm:$0xff]
    %v285 = vld [vmem:[%s5 + $0xb0] sm:$0xff]
    %v286 = vld [vmem:[%s5 + $0xb8] sm:$0xff]
    %v287 = vld [vmem:[%s5 + $0xc0] sm:$0xff]
    %v288 = vld [vmem:[%s5 + $0xc8] sm:$0xff]
    %v289 = vld [vmem:[%s5 + $0xd0] sm:$0xff]
    %v290 = vld [vmem:[%s5 + $0xd8] sm:$0xff]
    %v291 = vld [vmem:[%s5 + $0xe0] sm:$0xff]
    %v292 = vld [vmem:[%s5 + $0xe8] sm:$0xff]
    %v293 = vld [vmem:[%s5 + $0xf0] sm:$0xff]
    %v294 = vld [vmem:[%s5 + $0xf8] sm:$0xff]
    %v295 = vld [vmem:[#allocation6] sm:$0x1]
    %v297 = vlaneseq
    %v298 = vshrl.u32 %v297, 7
    %v299 = vsub.s32 0, %v298
    %v300 = vrot.slane %v295, %v299
    %302 = vmatprep.subr.mxu0 0.0
    %303 = vmatpush1.msra.mxu0 %v278
    %304 = vmatprep.subr.mxu0 0.0
    %305 = vmatpush1.msra.mxu0 %v277
    %306 = vmatprep.subr.mxu0 0.0
    %307 = vmatpush1.msra.mxu0 %v276
    %308 = vmatprep.subr.mxu0 0.0
    %309 = vmatpush1.msra.mxu0 %v275
    %310 = vmatprep.subr.mxu0 0.0
    %311 = vmatpush1.msra.mxu0 %v274
    %312 = vmatprep.subr.mxu0 0.0
    %313 = vmatpush1.msra.mxu0 %v273
    %314 = vmatprep.subr.mxu0 0.0
    %315 = vmatpush1.msra.mxu0 %v272
    %316 = vmatprep.subr.mxu0 0.0
    %317 = vmatpush1.msra.mxu0 %v271
    %318 = vmatprep.subr.mxu0 0.0
    %319 = vmatpush1.msra.mxu0 %v270
    %320 = vmatprep.subr.mxu0 0.0
    %321 = vmatpush1.msra.mxu0 %v269
    %322 = vmatprep.subr.mxu0 0.0
    %323 = vmatpush1.msra.mxu0 %v268
    %324 = vmatprep.subr.mxu0 0.0
    %325 = vmatpush1.msra.mxu0 %v267
    %326 = vmatprep.subr.mxu0 0.0
    %327 = vmatpush1.msra.mxu0 %v266
    %328 = vmatprep.subr.mxu0 0.0
    %329 = vmatpush1.msra.mxu0 %v265
    %330 = vmatprep.subr.mxu0 0.0
    %331 = vmatpush1.msra.mxu0 %v264
    %332 = vmatprep.subr.mxu0 0.0
    %333 = vmatpush1.msra.mxu0 %v263
    %334 = vmatprep.subr.mxu0 0.0
    %335 = vmatpush2.msra.mxu0 %v294
    %336 = vmatprep.subr.mxu0 0.0
    %337 = vmatpush2.msra.mxu0 %v293
    %338 = vmatprep.subr.mxu0 0.0
    %339 = vmatpush2.msra.mxu0 %v292
    %340 = vmatprep.subr.mxu0 0.0
    %341 = vmatpush2.msra.mxu0 %v291
    %342 = vmatprep.subr.mxu0 0.0
    %343 = vmatpush2.msra.mxu0 %v290
    %344 = vmatprep.subr.mxu0 0.0
    %345 = vmatpush2.msra.mxu0 %v289
    %346 = vmatprep.subr.mxu0 0.0
    %347 = vmatpush2.msra.mxu0 %v288
    %348 = vmatprep.subr.mxu0 0.0
    %349 = vmatpush2.msra.mxu0 %v287
    %350 = vmatprep.subr.mxu0 0.0
    %351 = vmatpush2.msra.mxu0 %v286
    %352 = vmatprep.subr.mxu0 0.0
    %353 = vmatpush2.msra.mxu0 %v285
    %354 = vmatprep.subr.mxu0 0.0
    %355 = vmatpush2.msra.mxu0 %v284
    %356 = vmatprep.subr.mxu0 0.0
    %357 = vmatpush2.msra.mxu0 %v283
    %358 = vmatprep.subr.mxu0 0.0
    %359 = vmatpush2.msra.mxu0 %v282
    %360 = vmatprep.subr.mxu0 0.0
    %361 = vmatpush2.msra.mxu0 %v281
    %362 = vmatprep.subr.mxu0 0.0
    %363 = vmatpush2.msra.mxu0 %v280
    %364 = vmatprep.subr.mxu0 0.0
    %365 = vmatpush2.msra.mxu0 %v279
    %366 = vmatprep.mubr.f32.mxu0 %v262
    %367 = vmatmul.mubr.f32.gmra.mxu0 %v261
    %v368 = vpop.f32.mrf.mxu0
    %v369 = vadd.f32 %v300, %v368
    %v370 = vpop.f32.mrf.mxu0
    %371 = vdwg.mxu0
    %vm372 = vcmask 31744
    %373 = vst.msk [vmem:[%s7] sm:$0xff] %vm372, %v369
    // Predicated region
    $region42: #{dueling_dqn_forward.1} parent=1 // pred_check
      _
    $region43: #{dueling_dqn_forward.1} parent=1 // pred_check_branch
      %375 = sbr.rel (0) target = $region45
    $region44: #{dueling_dqn_forward.1} parent=1 // pred_region
      _
    $region45: #{dueling_dqn_forward.1} parent=1 // pred_fallthru
      _
    // Predicated region
    $region46: #{dueling_dqn_forward.1} parent=1 // pred_check
      _
    $region47: #{dueling_dqn_forward.1} parent=1 // pred_check_branch
      %377 = sbr.rel (0) target = $region49
    $region48: #{dueling_dqn_forward.1} parent=1 // pred_region
      _
    $region49: #{dueling_dqn_forward.1} parent=1 // pred_fallthru
      _
    %378 = vsyncpa [#allocation3], 1
    %379 = vsyncpa [#allocation5], 1

</llo_original>
